<compile_context>
chip_gen: v5e
topology: v5e:2x2
jax: 0.10.0
libtpu: 0.0.40
codegen_flags: <defaults>
</compile_context>

<pallas_src>
import functools

import jax
import jax.numpy as jnp
from jax.experimental import pallas as pl
from jax.experimental.pallas import tpu as pltpu

_LANE = 128


def _round_up(v, m):
    return ((v + m - 1) // m) * m


@functools.lru_cache(maxsize=None)
def _vmem_capacity():
    # Generation-aware VMEM capacity (v5e/v6e: 128 MiB, v7x: 64 MiB per core).
    try:
        return int(pltpu.get_tpu_info().vmem_capacity_bytes)
    except Exception:
        return 64 * 1024 * 1024  # conservative fallback (v7x physical)


def _vmem_budget():
    # Per-grid-step working-set budget (leaves room for double buffering etc.).
    return max(8 * 1024 * 1024, min(_vmem_capacity() // 4, 32 * 1024 * 1024))


def _vmem_limit():
    # Scoped-VMEM limit handed to Mosaic.
    return max(16 * 1024 * 1024, min(_vmem_capacity() // 2, 64 * 1024 * 1024))


# ----------------------------------------------------------------------------
# Pallas kernel 1: fused GEMM + bias (+ReLU)   (1x1 convolutions)
# ----------------------------------------------------------------------------
def _mm_kernel(x_ref, w_ref, b_ref, o_ref, *, relu):
    acc = jnp.dot(x_ref[...], w_ref[...], preferred_element_type=jnp.float32)
    y = acc + b_ref[...]
    if relu:
        y = jnp.maximum(y, 0.0)
    o_ref[...] = y.astype(o_ref.dtype)


def _pick_tm(m, k, n, out_bytes):
    budget = _vmem_budget()
    fixed = 2 * (k * n * 2 + n * 4)                    # resident weights + bias
    per_row = 2 * (k * 2) + 2 * (n * out_bytes)        # double-buffered act/out
    tm = (budget - fixed) // max(per_row, 1)
    tm = max(8, min(8192, int(tm)))
    tm = (tm // 8) * 8
    return m if m <= tm else tm


def matmul_bias(x, w, bias, relu=False, out_dtype=jnp.bfloat16):
    """(x @ w) + bias (+ReLU). w is BN-folded bf16; f32 accumulation."""
    m, k = x.shape
    _, n = w.shape
    out_bytes = jnp.dtype(out_dtype).itemsize
    tm = _pick_tm(m, k, n, out_bytes)
    flops = 2 * m * k * n
    bytes_accessed = m * k * 2 + k * n * 2 + n * 4 + m * n * out_bytes
    out = pl.pallas_call(
        functools.partial(_mm_kernel, relu=relu),
        out_shape=jax.ShapeDtypeStruct((m, n), out_dtype),
        grid=(pl.cdiv(m, tm),),
        in_specs=[
            pl.BlockSpec((tm, k), lambda i: (i, 0)),   # activation tile
            pl.BlockSpec((k, n), lambda i: (0, 0)),    # resident weight
            pl.BlockSpec((1, n), lambda i: (0, 0)),    # bias
        ],
        out_specs=pl.BlockSpec((tm, n), lambda i: (i, 0)),
        compiler_params=pltpu.CompilerParams(
            dimension_semantics=("parallel",),
            vmem_limit_bytes=_vmem_limit()),
        cost_estimate=pl.CostEstimate(flops=flops, transcendentals=0,
                                      bytes_accessed=bytes_accessed),
    )(x.astype(jnp.bfloat16), w, bias)
    return out


# ----------------------------------------------------------------------------
# Pallas kernel 2: fused 3x3 conv (im2col-free "tap" accumulation)
# ----------------------------------------------------------------------------
def _tap_conv_kernel(*refs, taps, tm, relu, n_phase, static_base):
    phase_refs = refs[:n_phase]     # each (1, m_in, Cin) bf16, resident
    w_ref = refs[n_phase]           # (9, Cin, Cout) bf16, BN scale folded in
    b_ref = refs[n_phase + 1]       # (1, Cout) f32
    o_ref = refs[n_phase + 2]       # (1, tm, Cout)

    if static_base:                 # single M tile -> fully static slice starts
        base = 0
    else:
        base = pl.multiple_of(pl.program_id(1) * tm, 8)

    # 9 small bf16 MXU dots accumulated in f32; tap windows are read directly
    # from the bf16 VMEM refs (no whole-image f32 cast, no materialized copies).
    acc = None
    for t, (p_idx, delta) in enumerate(taps):
        xm = phase_refs[p_idx][0, pl.ds(base + delta, tm), :]
        part = jnp.dot(xm, w_ref[t], preferred_element_type=jnp.float32)
        acc = part if acc is None else acc + part

    y = acc + b_ref[...]
    if relu:
        y = jnp.maximum(y, 0.0)
    o_ref[0] = y.astype(o_ref.dtype)


def _pick_tap_tm(m_out, m_in, cin, cout, n_phase):
    budget = _vmem_budget()
    # Resident phase images + weights + bias (count double buffers).
    fixed = 2 * (n_phase * m_in * cin * 2 + 9 * cin * cout * 2 + cout * 4)
    # Per output row: tap loads (bf16), f32 accumulator (lane-padded), out tile.
    per_row = 9 * cin * 2 + _round_up(cout, _LANE) * 4 + 2 * cout * 4
    tm = (budget - fixed) // max(per_row, 1)
    tm = max(8, min(4096, int(tm)))
    tm = (tm // 8) * 8
    return m_out if m_out <= tm else tm


def conv3x3_bn_act(x, p, stride, relu, out_dtype=jnp.bfloat16):
    n, h, w_sp, cin = x.shape
    kh, kw, _, cout = p["w"].shape

    # Fold BN scale into the weights at trace time; keep true Cout (no padding).
    w_eff = (p["w"] * p["scale"][None, None, None, :]).reshape(kh * kw, cin, cout)
    w_eff = w_eff.astype(jnp.bfloat16)
    b_eff = p["bias"].reshape(1, cout).astype(jnp.float32)

    xb = x.astype(jnp.bfloat16)
    if stride == 1:
        ho, wo = h, w_sp
        wrow = _round_up(w_sp + 2, 8)          # sublane-aligned row stride
        hp = h + 3
        xp = jnp.pad(xb, ((0, 0), (1, hp - h - 1), (1, wrow - w_sp - 1), (0, 0)))
        phases = [xp.reshape(n, hp * wrow, cin)]
        taps = tuple((0, i * wrow + j) for i in range(3) for j in range(3))
        max_delta = 2 * wrow + 2
    else:  # stride == 2: decompose padded input into 2x2 phases so every tap
           # is a stride-1 contiguous row window of one phase.
        ho, wo = (h + 1) // 2, (w_sp + 1) // 2
        wrow = _round_up(wo + 1, 8)
        rows = ho + 2
        # TODO(synk): this pad + strided phase slice still materializes copies
        # in HBM via XLA; a strided DMA gather straight from NHWC would save
        # one activation read+write per downsampling conv.
        xp = jnp.pad(xb, ((0, 0), (1, 2 * rows - 1 - h),
                          (1, 2 * wrow - 1 - w_sp), (0, 0)))
        phases = [xp[:, pq // 2::2, pq % 2::2, :].reshape(n, rows * wrow, cin)
                  for pq in range(4)]
        taps = tuple(((i % 2) * 2 + (j % 2), (i // 2) * wrow + (j // 2))
                     for i in range(3) for j in range(3))
        max_delta = wrow + 1

    m_out = ho * wrow                 # includes discarded "wrap" columns
    m_in = phases[0].shape[1]
    n_phase = len(phases)

    # Tile the flattened spatial dim (accumulator/output), keep the small bf16
    # phase images resident per batch element.
    # TODO(synk): for inputs whose bf16 phase images themselves exceed the VMEM
    # budget, switch to manual halo DMA (make_async_copy) per M tile.
    tm = _pick_tap_tm(m_out, m_in, cin, cout, n_phase)
    m_tiles = pl.cdiv(m_out, tm)
    need = m_tiles * tm + max_delta
    if m_in < need:                   # keep in-kernel tap reads in bounds
        phases = [jnp.pad(ph, ((0, 0), (0, need - m_in), (0, 0)))
                  for ph in phases]
        m_in = need

    kernel = functools.partial(_tap_conv_kernel, taps=taps, tm=tm, relu=relu,
                               n_phase=n_phase, static_base=(m_tiles == 1))
    in_specs = ([pl.BlockSpec((1, m_in, cin), lambda b, mi: (b, 0, 0))] * n_phase
                + [pl.BlockSpec((kh * kw, cin, cout), lambda b, mi: (0, 0, 0)),
                   pl.BlockSpec((1, cout), lambda b, mi: (0, 0))])

    out_bytes = jnp.dtype(out_dtype).itemsize
    flops = 2 * n * m_out * (kh * kw * cin) * cout
    bytes_accessed = (n_phase * n * m_in * cin * 2 + kh * kw * cin * cout * 2
                      + cout * 4 + n * m_out * cout * out_bytes)

    out = pl.pallas_call(
        kernel,
        out_shape=jax.ShapeDtypeStruct((n, m_out, cout), out_dtype),
        grid=(n, m_tiles),
        in_specs=in_specs,
        out_specs=pl.BlockSpec((1, tm, cout), lambda b, mi: (b, mi, 0)),
        compiler_params=pltpu.CompilerParams(
            dimension_semantics=("parallel", "parallel"),
            vmem_limit_bytes=_vmem_limit()),
        cost_estimate=pl.CostEstimate(flops=flops, transcendentals=0,
                                      bytes_accessed=bytes_accessed),
    )(*phases, w_eff, b_eff)

    out = out.reshape(n, ho, wrow, cout)[:, :, :wo, :]
    return out


def conv1x1_bn_act(x, p, relu, out_dtype=jnp.bfloat16):
    n, h, w_sp, cin = x.shape
    cout = p["w"].shape[-1]
    w_eff = (p["w"].reshape(cin, cout) * p["scale"][None, :]).astype(jnp.bfloat16)
    b_eff = p["bias"].reshape(1, cout).astype(jnp.float32)
    y = matmul_bias(x.reshape(n * h * w_sp, cin), w_eff, b_eff,
                    relu=relu, out_dtype=out_dtype)
    return y.reshape(n, h, w_sp, cout)


def conv_bn_act(x, p, stride=1, relu=True, out_dtype=jnp.bfloat16):
    if p["w"].shape[0] == 1:
        return conv1x1_bn_act(x, p, relu, out_dtype)
    return conv3x3_bn_act(x, p, stride, relu, out_dtype)


# ----------------------------------------------------------------------------
# Flow Alignment Module pieces (glue in plain JAX)
# ----------------------------------------------------------------------------
def _bilinear_resize(x, ho, wo):
    n, h, w_sp, c = x.shape
    return jax.image.resize(x.astype(jnp.float32), (n, ho, wo, c),
                            method="bilinear")


def _flow_warp(feat, flow):
    # feat: (N,H,W,C) f32; flow: (N,H,W,2) pixel offsets (dx, dy); bilinear.
    n, h, w_sp, c = feat.shape
    ys, xs = jnp.meshgrid(jnp.arange(h, dtype=jnp.float32),
                          jnp.arange(w_sp, dtype=jnp.float32), indexing="ij")
    xf = xs[None] + flow[..., 0]
    yf = ys[None] + flow[..., 1]
    x0 = jnp.floor(xf)
    y0 = jnp.floor(yf)
    wx = (xf - x0)[..., None]
    wy = (yf - y0)[..., None]
    flat = feat.reshape(n, h * w_sp, c)

    def gather(yi, xi):
        yi = jnp.clip(yi, 0, h - 1).astype(jnp.int32)
        xi = jnp.clip(xi, 0, w_sp - 1).astype(jnp.int32)
        idx = (yi * w_sp + xi).reshape(n, h * w_sp, 1)
        return jnp.take_along_axis(flat, idx, axis=1).reshape(n, h, w_sp, c)

    v00 = gather(y0, x0)
    v01 = gather(y0, x0 + 1.0)
    v10 = gather(y0 + 1.0, x0)
    v11 = gather(y0 + 1.0, x0 + 1.0)
    top = v00 * (1.0 - wx) + v01 * wx
    bot = v10 * (1.0 - wx) + v11 * wx
    return top * (1.0 - wy) + bot * wy


def _fam(fine, coarse, flow_p):
    """Flow Alignment Module: predict flow from [fine, up(coarse)], warp, add."""
    n, h, w_sp, c = fine.shape
    up = _bilinear_resize(coarse, h, w_sp)                     # f32
    fuse = jnp.concatenate([fine.astype(jnp.bfloat16),
                            up.astype(jnp.bfloat16)], axis=-1)  # bf16 concat
    flow = conv_bn_act(fuse, flow_p, stride=1, relu=False, out_dtype=jnp.float32)
    # TODO(synk): the flow-warp bilinear gather (grid_sample) stays in plain
    # JAX; its data-dependent gather is not expressible via a BlockSpec
    # index_map without manual DMA gathers.
    warped = _flow_warp(up, flow)
    return fine.astype(jnp.float32) + warped


# ----------------------------------------------------------------------------
# Deterministic parameter init (synthetic — no checkpoint loading)
# ----------------------------------------------------------------------------
def _conv_params(key, kh, kw, cin, cout):
    k1, k2, k3 = jax.random.split(key, 3)
    fan_in = kh * kw * cin
    w = jax.random.normal(k1, (kh, kw, cin, cout), jnp.float32) / jnp.sqrt(fan_in)
    scale = 1.0 + 0.01 * jax.random.normal(k2, (cout,), jnp.float32)  # folded BN
    bias = 0.01 * jax.random.normal(k3, (cout,), jnp.float32)
    return {"w": w, "scale": scale, "bias": bias}


def init_sfnet_lite_params(key, in_ch=3, num_classes=19, fpn_ch=32):
    keys = jax.random.split(key, 11)
    c1, c2, c3, c4 = 16, 32, 48, 64
    return {
        # TODO(synk): cin=3 stem keeps a (rows, 3) lane-sparse layout; a K=27
        # in-VMEM repack needs unaligned lane concat support to be worthwhile.
        "stem": _conv_params(keys[0], 3, 3, in_ch, c1),     # 1/2
        "c2":   _conv_params(keys[1], 3, 3, c1, c2),        # 1/4
        "c3":   _conv_params(keys[2], 3, 3, c2, c3),        # 1/8
        "c4":   _conv_params(keys[3], 3, 3, c3, c4),        # 1/16
        "lat2": _conv_params(keys[4], 1, 1, c2, fpn_ch),
        "lat3": _conv_params(keys[5], 1, 1, c3, fpn_ch),
        "lat4": _conv_params(keys[6], 1, 1, c4, fpn_ch),
        "flow3": _conv_params(keys[7], 3, 3, 2 * fpn_ch, 2),
        "flow2": _conv_params(keys[8], 3, 3, 2 * fpn_ch, 2),
        "head": _conv_params(keys[9], 3, 3, fpn_ch, fpn_ch),
        "cls":  _conv_params(keys[10], 1, 1, fpn_ch, num_classes),
    }


# ----------------------------------------------------------------------------
# Forward pass (SFNetLite.forward equivalent)
# ----------------------------------------------------------------------------
def sfnet_lite_forward(params, x_nchw):
    # layout: NCHW (PyTorch) in -> NHWC internal -> NCHW out.
    x = jnp.transpose(x_nchw, (0, 2, 3, 1)).astype(jnp.float32)
    n, h, w_sp, _ = x.shape

    s = conv_bn_act(x, params["stem"], stride=2)              # 1/2
    c2 = conv_bn_act(s, params["c2"], stride=2)               # 1/4
    c3 = conv_bn_act(c2, params["c3"], stride=2)              # 1/8
    c4 = conv_bn_act(c3, params["c4"], stride=2)              # 1/16

    p2 = conv_bn_act(c2, params["lat2"], relu=False)
    p3 = conv_bn_act(c3, params["lat3"], relu=False)
    p4 = conv_bn_act(c4, params["lat4"], relu=False)

    p3 = _fam(p3, p4, params["flow3"])                        # align 1/16 -> 1/8
    p2 = _fam(p2, p3, params["flow2"])                        # align 1/8  -> 1/4

    hfeat = conv_bn_act(p2, params["head"], relu=True)
    logits = conv_bn_act(hfeat, params["cls"], relu=False,
                         out_dtype=jnp.bfloat16)              # (N, H/4, W/4, 19)
    logits = _bilinear_resize(logits, h, w_sp)                # f32, input res
    return jnp.transpose(logits, (0, 3, 1, 2))                # NCHW


# ----------------------------------------------------------------------------
# Numeric reference for the fused 3x3 kernel (bf16-rounded inputs, f32 conv)
# ----------------------------------------------------------------------------
def _conv3x3_reference(x, p, stride, relu):
    w_eff = (p["w"] * p["scale"][None, None, None, :])
    w_eff = w_eff.astype(jnp.bfloat16).astype(jnp.float32)
    xq = x.astype(jnp.bfloat16).astype(jnp.float32)
    y = jax.lax.conv_general_dilated(
        xq, w_eff, window_strides=(stride, stride),
        padding=((1, 1), (1, 1)),
        dimension_numbers=("NHWC", "HWIO", "NHWC"),
        precision=jax.lax.Precision.HIGHEST)
    y = y + p["bias"][None, None, None, :]
    if relu:
        y = jnp.maximum(y, 0.0)
    return y


if __name__ == "__main__":
    key = jax.random.PRNGKey(0)
    pkey, xkey, ckey = jax.random.split(key, 3)

    # Spot-check the fused 3x3 tap kernel (stride 1/2, odd H/W) vs XLA conv.
    for (hh, ww, cin, cout, stride) in [(9, 11, 3, 16, 2),
                                        (8, 8, 32, 48, 2),
                                        (7, 10, 16, 32, 1)]:
        k1, k2, ckey = jax.random.split(ckey, 3)
        xt = jax.random.normal(k1, (2, hh, ww, cin), jnp.float32)
        pt = _conv_params(k2, 3, 3, cin, cout)
        got = conv3x3_bn_act(xt, pt, stride=stride, relu=True,
                             out_dtype=jnp.float32)
        ref = _conv3x3_reference(xt, pt, stride, True)
        err = float(jnp.max(jnp.abs(got.astype(jnp.float32) - ref)))
        assert err < 2e-2, (stride, cin, cout, err)

    params = init_sfnet_lite_params(pkey, in_ch=3, num_classes=19)
    x = jax.random.normal(xkey, (2, 3, 32, 32), jnp.float32)

    out = jax.jit(sfnet_lite_forward)(params, x)
    jax.block_until_ready(out)
    assert out.shape == (2, 19, 32, 32), out.shape
    assert bool(jnp.all(jnp.isfinite(out)))
    print("KERNEL_OK")
</pallas_src>

<mosaic_0001>
module attributes {stable_mosaic.version = 11 : i64} {
  func.func @_tap_conv_kernel(%arg0: i32, %arg1: i32, %arg2: memref<1x56x3xbf16, #tpu.memory_space<vmem>>, %arg3: memref<1x56x3xbf16, #tpu.memory_space<vmem>>, %arg4: memref<1x56x3xbf16, #tpu.memory_space<vmem>>, %arg5: memref<1x56x3xbf16, #tpu.memory_space<vmem>>, %arg6: memref<9x3x16xbf16, #tpu.memory_space<vmem>>, %arg7: memref<1x16xf32, #tpu.memory_space<vmem>>, %arg8: memref<1x40x16xf32, #tpu.memory_space<vmem>>) attributes {dimension_semantics = [#tpu.dimension_semantics<parallel>, #tpu.dimension_semantics<parallel>], iteration_bounds = array<i64: 2, 1>, scalar_prefetch = 0 : i64, scratch_operands = 0 : i64, tpu.core_type = #tpu.core_type<tc>, window_params = [{transform_indices = @transform_0, window_bounds = array<i64: 1, 56, 3>}, {transform_indices = @transform_1, window_bounds = array<i64: 1, 56, 3>}, {transform_indices = @transform_2, window_bounds = array<i64: 1, 56, 3>}, {transform_indices = @transform_3, window_bounds = array<i64: 1, 56, 3>}, {pipeline_mode = #tpu.pipeline_mode<synchronous>, transform_indices = @transform_4, window_bounds = array<i64: 9, 3, 16>}, {pipeline_mode = #tpu.pipeline_mode<synchronous>, transform_indices = @transform_5, window_bounds = array<i64: 1, 16>}, {transform_indices = @transform_6, window_bounds = array<i64: 1, 40, 16>}]} {
    %c0 = arith.constant 0 : index
    %c0_0 = arith.constant 0 : index
    %c0_1 = arith.constant 0 : index
    %0 = vector.load %arg2[%c0, %c0_0, %c0_1] : memref<1x56x3xbf16, #tpu.memory_space<vmem>>, vector<1x40x3xbf16>
    %1 = vector.shape_cast %0 : vector<1x40x3xbf16> to vector<40x3xbf16>
    %c0_2 = arith.constant 0 : index
    %c0_3 = arith.constant 0 : index
    %c0_4 = arith.constant 0 : index
    %2 = vector.load %arg6[%c0_2, %c0_3, %c0_4] : memref<9x3x16xbf16, #tpu.memory_space<vmem>>, vector<1x3x16xbf16>
    %3 = vector.shape_cast %2 : vector<1x3x16xbf16> to vector<3x16xbf16>
    %cst = arith.constant dense<0.000000e+00> : vector<40x16xf32>
    %4 = tpu.matmul %1, %3, %cst {dimension_numbers = #tpu.dot_dimension_numbers<[1], [0], [0], [1], [0, 0, 1, 1], [], []>} : vector<40x3xbf16>, vector<3x16xbf16>, vector<40x16xf32> -> vector<40x16xf32>
    %c0_5 = arith.constant 0 : index
    %c0_6 = arith.constant 0 : index
    %c0_7 = arith.constant 0 : index
    %5 = vector.load %arg3[%c0_5, %c0_6, %c0_7] : memref<1x56x3xbf16, #tpu.memory_space<vmem>>, vector<1x40x3xbf16>
    %6 = vector.shape_cast %5 : vector<1x40x3xbf16> to vector<40x3xbf16>
    %c1 = arith.constant 1 : index
    %c0_8 = arith.constant 0 : index
    %c0_9 = arith.constant 0 : index
    %7 = vector.load %arg6[%c1, %c0_8, %c0_9] : memref<9x3x16xbf16, #tpu.memory_space<vmem>>, vector<1x3x16xbf16>
    %8 = vector.shape_cast %7 : vector<1x3x16xbf16> to vector<3x16xbf16>
    %cst_10 = arith.constant dense<0.000000e+00> : vector<40x16xf32>
    %9 = tpu.matmul %6, %8, %cst_10 {dimension_numbers = #tpu.dot_dimension_numbers<[1], [0], [0], [1], [0, 0, 1, 1], [], []>} : vector<40x3xbf16>, vector<3x16xbf16>, vector<40x16xf32> -> vector<40x16xf32>
    %10 = arith.addf %4, %9 : vector<40x16xf32>
    %c0_11 = arith.constant 0 : index
    %c1_12 = arith.constant 1 : index
    %c0_13 = arith.constant 0 : index
    %11 = vector.load %arg2[%c0_11, %c1_12, %c0_13] : memref<1x56x3xbf16, #tpu.memory_space<vmem>>, vector<1x40x3xbf16>
    %12 = vector.shape_cast %11 : vector<1x40x3xbf16> to vector<40x3xbf16>
    %c2 = arith.constant 2 : index
    %c0_14 = arith.constant 0 : index
    %c0_15 = arith.constant 0 : index
    %13 = vector.load %arg6[%c2, %c0_14, %c0_15] : memref<9x3x16xbf16, #tpu.memory_space<vmem>>, vector<1x3x16xbf16>
    %14 = vector.shape_cast %13 : vector<1x3x16xbf16> to vector<3x16xbf16>
    %cst_16 = arith.constant dense<0.000000e+00> : vector<40x16xf32>
    %15 = tpu.matmul %12, %14, %cst_16 {dimension_numbers = #tpu.dot_dimension_numbers<[1], [0], [0], [1], [0, 0, 1, 1], [], []>} : vector<40x3xbf16>, vector<3x16xbf16>, vector<40x16xf32> -> vector<40x16xf32>
    %16 = arith.addf %10, %15 : vector<40x16xf32>
    %c0_17 = arith.constant 0 : index
    %c0_18 = arith.constant 0 : index
    %c0_19 = arith.constant 0 : index
    %17 = vector.load %arg4[%c0_17, %c0_18, %c0_19] : memref<1x56x3xbf16, #tpu.memory_space<vmem>>, vector<1x40x3xbf16>
    %18 = vector.shape_cast %17 : vector<1x40x3xbf16> to vector<40x3xbf16>
    %c3 = arith.constant 3 : index
    %c0_20 = arith.constant 0 : index
    %c0_21 = arith.constant 0 : index
    %19 = vector.load %arg6[%c3, %c0_20, %c0_21] : memref<9x3x16xbf16, #tpu.memory_space<vmem>>, vector<1x3x16xbf16>
    %20 = vector.shape_cast %19 : vector<1x3x16xbf16> to vector<3x16xbf16>
    %cst_22 = arith.constant dense<0.000000e+00> : vector<40x16xf32>
    %21 = tpu.matmul %18, %20, %cst_22 {dimension_numbers = #tpu.dot_dimension_numbers<[1], [0], [0], [1], [0, 0, 1, 1], [], []>} : vector<40x3xbf16>, vector<3x16xbf16>, vector<40x16xf32> -> vector<40x16xf32>
    %22 = arith.addf %16, %21 : vector<40x16xf32>
    %c0_23 = arith.constant 0 : index
    %c0_24 = arith.constant 0 : index
    %c0_25 = arith.constant 0 : index
    %23 = vector.load %arg5[%c0_23, %c0_24, %c0_25] : memref<1x56x3xbf16, #tpu.memory_space<vmem>>, vector<1x40x3xbf16>
    %24 = vector.shape_cast %23 : vector<1x40x3xbf16> to vector<40x3xbf16>
    %c4 = arith.constant 4 : index
    %c0_26 = arith.constant 0 : index
    %c0_27 = arith.constant 0 : index
    %25 = vector.load %arg6[%c4, %c0_26, %c0_27] : memref<9x3x16xbf16, #tpu.memory_space<vmem>>, vector<1x3x16xbf16>
    %26 = vector.shape_cast %25 : vector<1x3x16xbf16> to vector<3x16xbf16>
    %cst_28 = arith.constant dense<0.000000e+00> : vector<40x16xf32>
    %27 = tpu.matmul %24, %26, %cst_28 {dimension_numbers = #tpu.dot_dimension_numbers<[1], [0], [0], [1], [0, 0, 1, 1], [], []>} : vector<40x3xbf16>, vector<3x16xbf16>, vector<40x16xf32> -> vector<40x16xf32>
    %28 = arith.addf %22, %27 : vector<40x16xf32>
    %c0_29 = arith.constant 0 : index
    %c1_30 = arith.constant 1 : index
    %c0_31 = arith.constant 0 : index
    %29 = vector.load %arg4[%c0_29, %c1_30, %c0_31] : memref<1x56x3xbf16, #tpu.memory_space<vmem>>, vector<1x40x3xbf16>
    %30 = vector.shape_cast %29 : vector<1x40x3xbf16> to vector<40x3xbf16>
    %c5 = arith.constant 5 : index
    %c0_32 = arith.constant 0 : index
    %c0_33 = arith.constant 0 : index
    %31 = vector.load %arg6[%c5, %c0_32, %c0_33] : memref<9x3x16xbf16, #tpu.memory_space<vmem>>, vector<1x3x16xbf16>
    %32 = vector.shape_cast %31 : vector<1x3x16xbf16> to vector<3x16xbf16>
    %cst_34 = arith.constant dense<0.000000e+00> : vector<40x16xf32>
    %33 = tpu.matmul %30, %32, %cst_34 {dimension_numbers = #tpu.dot_dimension_numbers<[1], [0], [0], [1], [0, 0, 1, 1], [], []>} : vector<40x3xbf16>, vector<3x16xbf16>, vector<40x16xf32> -> vector<40x16xf32>
    %34 = arith.addf %28, %33 : vector<40x16xf32>
    %c0_35 = arith.constant 0 : index
    %c8 = arith.constant 8 : index
    %c0_36 = arith.constant 0 : index
    %35 = vector.load %arg2[%c0_35, %c8, %c0_36] : memref<1x56x3xbf16, #tpu.memory_space<vmem>>, vector<1x40x3xbf16>
    %36 = vector.shape_cast %35 : vector<1x40x3xbf16> to vector<40x3xbf16>
    %c6 = arith.constant 6 : index
    %c0_37 = arith.constant 0 : index
    %c0_38 = arith.constant 0 : index
    %37 = vector.load %arg6[%c6, %c0_37, %c0_38] : memref<9x3x16xbf16, #tpu.memory_space<vmem>>, vector<1x3x16xbf16>
    %38 = vector.shape_cast %37 : vector<1x3x16xbf16> to vector<3x16xbf16>
    %cst_39 = arith.constant dense<0.000000e+00> : vector<40x16xf32>
    %39 = tpu.matmul %36, %38, %cst_39 {dimension_numbers = #tpu.dot_dimension_numbers<[1], [0], [0], [1], [0, 0, 1, 1], [], []>} : vector<40x3xbf16>, vector<3x16xbf16>, vector<40x16xf32> -> vector<40x16xf32>
    %40 = arith.addf %34, %39 : vector<40x16xf32>
    %c0_40 = arith.constant 0 : index
    %c8_41 = arith.constant 8 : index
    %c0_42 = arith.constant 0 : index
    %41 = vector.load %arg3[%c0_40, %c8_41, %c0_42] : memref<1x56x3xbf16, #tpu.memory_space<vmem>>, vector<1x40x3xbf16>
    %42 = vector.shape_cast %41 : vector<1x40x3xbf16> to vector<40x3xbf16>
    %c7 = arith.constant 7 : index
    %c0_43 = arith.constant 0 : index
    %c0_44 = arith.constant 0 : index
    %43 = vector.load %arg6[%c7, %c0_43, %c0_44] : memref<9x3x16xbf16, #tpu.memory_space<vmem>>, vector<1x3x16xbf16>
    %44 = vector.shape_cast %43 : vector<1x3x16xbf16> to vector<3x16xbf16>
    %cst_45 = arith.constant dense<0.000000e+00> : vector<40x16xf32>
    %45 = tpu.matmul %42, %44, %cst_45 {dimension_numbers = #tpu.dot_dimension_numbers<[1], [0], [0], [1], [0, 0, 1, 1], [], []>} : vector<40x3xbf16>, vector<3x16xbf16>, vector<40x16xf32> -> vector<40x16xf32>
    %46 = arith.addf %40, %45 : vector<40x16xf32>
    %c0_46 = arith.constant 0 : index
    %c9 = arith.constant 9 : index
    %c0_47 = arith.constant 0 : index
    %47 = vector.load %arg2[%c0_46, %c9, %c0_47] : memref<1x56x3xbf16, #tpu.memory_space<vmem>>, vector<1x40x3xbf16>
    %48 = vector.shape_cast %47 : vector<1x40x3xbf16> to vector<40x3xbf16>
    %c8_48 = arith.constant 8 : index
    %c0_49 = arith.constant 0 : index
    %c0_50 = arith.constant 0 : index
    %49 = vector.load %arg6[%c8_48, %c0_49, %c0_50] : memref<9x3x16xbf16, #tpu.memory_space<vmem>>, vector<1x3x16xbf16>
    %50 = vector.shape_cast %49 : vector<1x3x16xbf16> to vector<3x16xbf16>
    %cst_51 = arith.constant dense<0.000000e+00> : vector<40x16xf32>
    %51 = tpu.matmul %48, %50, %cst_51 {dimension_numbers = #tpu.dot_dimension_numbers<[1], [0], [0], [1], [0, 0, 1, 1], [], []>} : vector<40x3xbf16>, vector<3x16xbf16>, vector<40x16xf32> -> vector<40x16xf32>
    %52 = arith.addf %46, %51 : vector<40x16xf32>
    %c0_52 = arith.constant 0 : index
    %c0_53 = arith.constant 0 : index
    %53 = vector.load %arg7[%c0_52, %c0_53] : memref<1x16xf32, #tpu.memory_space<vmem>>, vector<1x16xf32>
    %54 = vector.broadcast %53 : vector<1x16xf32> to vector<40x16xf32>
    %55 = arith.addf %52, %54 : vector<40x16xf32>
    %cst_54 = arith.constant 0.000000e+00 : f32
    %56 = vector.broadcast %cst_54 : f32 to vector<40x16xf32>
    %57 = arith.maximumf %55, %56 : vector<40x16xf32>
    %c0_55 = arith.constant 0 : index
    %c0_56 = arith.constant 0 : index
    %c0_57 = arith.constant 0 : index
    %58 = vector.load %arg8[%c0_55, %c0_56, %c0_57] : memref<1x40x16xf32, #tpu.memory_space<vmem>>, vector<1x40x16xf32>
    %59 = vector.shape_cast %58 : vector<1x40x16xf32> to vector<40x16xf32>
    %60 = vector.shape_cast %57 : vector<40x16xf32> to vector<1x40x16xf32>
    tpu.vector_store %arg8[%c0_55, %c0_56, %c0_57], %60 {strides = array<i32>} : memref<1x40x16xf32, #tpu.memory_space<vmem>>, vector<1x40x16xf32>,
    return
  }
  func.func @transform_0(%arg0: i32, %arg1: i32) -> (i32, i32, i32) {
    %c0_i32 = arith.constant 0 : i32
    %c0_i32_0 = arith.constant 0 : i32
    %c0_i32_1 = arith.constant 0 : i32
    return %arg0, %c0_i32, %c0_i32_0 : i32, i32, i32
  }
  func.func @transform_1(%arg0: i32, %arg1: i32) -> (i32, i32, i32) {
    %c0_i32 = arith.constant 0 : i32
    %c0_i32_0 = arith.constant 0 : i32
    %c0_i32_1 = arith.constant 0 : i32
    return %arg0, %c0_i32, %c0_i32_0 : i32, i32, i32
  }
  func.func @transform_2(%arg0: i32, %arg1: i32) -> (i32, i32, i32) {
    %c0_i32 = arith.constant 0 : i32
    %c0_i32_0 = arith.constant 0 : i32
    %c0_i32_1 = arith.constant 0 : i32
    return %arg0, %c0_i32, %c0_i32_0 : i32, i32, i32
  }
  func.func @transform_3(%arg0: i32, %arg1: i32) -> (i32, i32, i32) {
    %c0_i32 = arith.constant 0 : i32
    %c0_i32_0 = arith.constant 0 : i32
    %c0_i32_1 = arith.constant 0 : i32
    return %arg0, %c0_i32, %c0_i32_0 : i32, i32, i32
  }
  func.func @transform_4(%arg0: i32, %arg1: i32) -> (i32, i32, i32) {
    %c0_i32 = arith.constant 0 : i32
    %c0_i32_0 = arith.constant 0 : i32
    %c0_i32_1 = arith.constant 0 : i32
    %c0_i32_2 = arith.constant 0 : i32
    return %c0_i32, %c0_i32_0, %c0_i32_1 : i32, i32, i32
  }
  func.func @transform_5(%arg0: i32, %arg1: i32) -> (i32, i32) {
    %c0_i32 = arith.constant 0 : i32
    %c0_i32_0 = arith.constant 0 : i32
    %c0_i32_1 = arith.constant 0 : i32
    return %c0_i32, %c0_i32_0 : i32, i32
  }
  func.func @transform_6(%arg0: i32, %arg1: i32) -> (i32, i32, i32) {
    %c0_i32 = arith.constant 0 : i32
    %c0_i32_0 = arith.constant 0 : i32
    return %arg0, %arg1, %c0_i32 : i32, i32, i32
  }
}

</mosaic_0001>

<llo_original>
// kernel: tpu_custom_call.1
$region0: #{tpu_custom_call.1}
  #allocation0 [shape = 'u32[]', space=smem, size = 0x4, offset = 0x4, fixed_abs, tag = 'smem constant byte address 0x4 - core index']
  #allocation1 [shape = 'u32[72,128]{1,0:T(1,128)}', space=vmem, size = 0x9000, scoped, tag = 'internal scratch']
  %s0 = inlined_call_operand.vmem [shape: bf16[2,56,3], index: 0, kind: input, shape index: {}]
  %s1 = inlined_call_operand.vmem [shape: bf16[2,56,3], index: 1, kind: input, shape index: {}]
  %s2 = inlined_call_operand.vmem [shape: bf16[2,56,3], index: 2, kind: input, shape index: {}]
  %s3 = inlined_call_operand.vmem [shape: bf16[2,56,3], index: 3, kind: input, shape index: {}]
  %s4 = inlined_call_operand.vmem [shape: bf16[9,3,16], index: 4, kind: input, shape index: {}]
  %s5 = inlined_call_operand.vmem [shape: f32[1,16], index: 5, kind: input, shape index: {}]
  %s6 = inlined_call_operand.vmem [shape: f32[2,40,16], index: 6, kind: output, shape index: {}]
  %s7 = sld [smem:[#allocation0]]
  $region57: #{tpu_custom_call.1} parent=0
    _
  %s9 = ssub.s32 1, %s7
  %s10 = scalar_select 0, %s9, %s7
  loop: start=0, step=1, limit=4
  $region2: #{tpu_custom_call.1} parent=0 // loop_pre_header
    _
  $region3: #{tpu_custom_call.1} parent=0 // loop_header
    %s12 = sphi 0, %s16
    %p13 = scmp.ge.s32.totalorder %s12, 4
    %s19 = sphi 0, %s31
    %s20 = sphi 0, %s27
    %s21 = sphi 0, %s19
    %s22 = sphi 0, %s20
    %s23 = sphi 0, %s21
    %s24 = sphi 0, %s22
    %s34 = sphi 0, %s36
    %s37 = sphi 0, %s34
    %s38 = sphi 0, %s37
    %s54 = sphi 0, %s38
    %s60 = sphi 0, %s62
    %s63 = sphi 0, %s60
    %s64 = sphi 0, %s63
    %s80 = sphi 0, %s64
    %s86 = sphi 0, %s88
    %s89 = sphi 0, %s86
    %s90 = sphi 0, %s89
    %s106 = sphi 0, %s90
    %s112 = sphi 0, %s114
    %s115 = sphi 0, %s112
    %s116 = sphi 0, %s115
    %s132 = sphi 0, %s116
    %s136 = sphi 0, %s136
    %s138 = sphi 0, %s136
    %s139 = sphi 0, %s138
    %s153 = sphi 0, %s139
    %s157 = sphi 0, %s157
    %s159 = sphi 0, %s157
    %s160 = sphi 0, %s159
    %s174 = sphi 0, %s160
    %s182 = sphi 0, %s184
    %s185 = sphi 0, %s182
    %s186 = sphi 0, %s185
    %s202 = sphi 0, %s186
  $region4: #{tpu_custom_call.1} parent=0 // loop_header_branch
    %15 = sbr.rel (%p13) target = $region8
  $region5: #{tpu_custom_call.1} parent=0 // loop_body
    %s17 = ssub.s32 %s12, 1
    %s18 = ssub.s32 %s12, 2
    %s25 = sadd.s32 1, %s20
    %p26 = scmp.ge.s32.totalorder %s25, 1
    %s27 = scalar_select %p26, 0, %s25
    %s28 = sadd.s32 1, %s19
    %s29 = scalar_select %p26, %s28, %s19
    %p30 = scmp.ge.s32.totalorder %s29, 2
    %s31 = scalar_select %p30, 0, %s29
    %s32 = ssub.s32 %s19, %s31
    %p33 = scmp.eq.s32.totalorder %s32, 0
    %s35 = sadd.s32 %s34, 1
    %s36 = scalar_select %p33, %s34, %s35
    %p39 = pneg %p33
    %p40 = scmp.eq.s32.totalorder %s12, 1
    %p41 = por %p39, %p40
    %p42 = scmp.ne.s32.totalorder %s34, %s37
    %p43 = scmp.eq.s32.totalorder %s12, 0
    %p44 = por %p42, %p43
    %p45 = scmp.ne.s32.totalorder %s34, %s37
    %p46 = scmp.eq.s32.totalorder %s17, 1
    %p47 = por %p45, %p46
    %p48 = scmp.ne.s32.totalorder %s37, %s38
    %p49 = scmp.eq.s32.totalorder %s17, 0
    %p50 = por %p48, %p49
    %p51 = scmp.ne.s32.totalorder %s37, %s38
    %p52 = scmp.eq.s32.totalorder %s18, 1
    %p53 = por %p51, %p52
    %p55 = scmp.ne.s32.totalorder %s38, %s54
    %p56 = scmp.eq.s32.totalorder %s18, 0
    %p57 = por %p55, %p56
    %s58 = ssub.s32 %s19, %s31
    %p59 = scmp.eq.s32.totalorder %s58, 0
    %s61 = sadd.s32 %s60, 1
    %s62 = scalar_select %p59, %s60, %s61
    %p65 = pneg %p59
    %p66 = scmp.eq.s32.totalorder %s12, 1
    %p67 = por %p65, %p66
    %p68 = scmp.ne.s32.totalorder %s60, %s63
    %p69 = scmp.eq.s32.totalorder %s12, 0
    %p70 = por %p68, %p69
    %p71 = scmp.ne.s32.totalorder %s60, %s63
    %p72 = scmp.eq.s32.totalorder %s17, 1
    %p73 = por %p71, %p72
    %p74 = scmp.ne.s32.totalorder %s63, %s64
    %p75 = scmp.eq.s32.totalorder %s17, 0
    %p76 = por %p74, %p75
    %p77 = scmp.ne.s32.totalorder %s63, %s64
    %p78 = scmp.eq.s32.totalorder %s18, 1
    %p79 = por %p77, %p78
    %p81 = scmp.ne.s32.totalorder %s64, %s80
    %p82 = scmp.eq.s32.totalorder %s18, 0
    %p83 = por %p81, %p82
    %s84 = ssub.s32 %s19, %s31
    %p85 = scmp.eq.s32.totalorder %s84, 0
    %s87 = sadd.s32 %s86, 1
    %s88 = scalar_select %p85, %s86, %s87
    %p91 = pneg %p85
    %p92 = scmp.eq.s32.totalorder %s12, 1
    %p93 = por %p91, %p92
    %p94 = scmp.ne.s32.totalorder %s86, %s89
    %p95 = scmp.eq.s32.totalorder %s12, 0
    %p96 = por %p94, %p95
    %p97 = scmp.ne.s32.totalorder %s86, %s89
    %p98 = scmp.eq.s32.totalorder %s17, 1
    %p99 = por %p97, %p98
    %p100 = scmp.ne.s32.totalorder %s89, %s90
    %p101 = scmp.eq.s32.totalorder %s17, 0
    %p102 = por %p100, %p101
    %p103 = scmp.ne.s32.totalorder %s89, %s90
    %p104 = scmp.eq.s32.totalorder %s18, 1
    %p105 = por %p103, %p104
    %p107 = scmp.ne.s32.totalorder %s90, %s106
    %p108 = scmp.eq.s32.totalorder %s18, 0
    %p109 = por %p107, %p108
    %s110 = ssub.s32 %s19, %s31
    %p111 = scmp.eq.s32.totalorder %s110, 0
    %s113 = sadd.s32 %s112, 1
    %s114 = scalar_select %p111, %s112, %s113
    %p117 = pneg %p111
    %p118 = scmp.eq.s32.totalorder %s12, 1
    %p119 = por %p117, %p118
    %p120 = scmp.ne.s32.totalorder %s112, %s115
    %p121 = scmp.eq.s32.totalorder %s12, 0
    %p122 = por %p120, %p121
    %p123 = scmp.ne.s32.totalorder %s112, %s115
    %p124 = scmp.eq.s32.totalorder %s17, 1
    %p125 = por %p123, %p124
    %p126 = scmp.ne.s32.totalorder %s115, %s116
    %p127 = scmp.eq.s32.totalorder %s17, 0
    %p128 = por %p126, %p127
    %p129 = scmp.ne.s32.totalorder %s115, %s116
    %p130 = scmp.eq.s32.totalorder %s18, 1
    %p131 = por %p129, %p130
    %p133 = scmp.ne.s32.totalorder %s116, %s132
    %p134 = scmp.eq.s32.totalorder %s18, 0
    %p135 = por %p133, %p134
    %s137 = sadd.s32 %s136, 1
    %p140 = scmp.eq.s32.totalorder %s12, 1
    %p141 = scmp.ne.s32.totalorder %s136, %s138
    %p142 = scmp.eq.s32.totalorder %s12, 0
    %p143 = por %p141, %p142
    %p144 = scmp.ne.s32.totalorder %s136, %s138
    %p145 = scmp.eq.s32.totalorder %s17, 1
    %p146 = por %p144, %p145
    %p147 = scmp.ne.s32.totalorder %s138, %s139
    %p148 = scmp.eq.s32.totalorder %s17, 0
    %p149 = por %p147, %p148
    %p150 = scmp.ne.s32.totalorder %s138, %s139
    %p151 = scmp.eq.s32.totalorder %s18, 1
    %p152 = por %p150, %p151
    %p154 = scmp.ne.s32.totalorder %s139, %s153
    %p155 = scmp.eq.s32.totalorder %s18, 0
    %p156 = por %p154, %p155
    %s158 = sadd.s32 %s157, 1
    %p161 = scmp.eq.s32.totalorder %s12, 1
    %p162 = scmp.ne.s32.totalorder %s157, %s159
    %p163 = scmp.eq.s32.totalorder %s12, 0
    %p164 = por %p162, %p163
    %p165 = scmp.ne.s32.totalorder %s157, %s159
    %p166 = scmp.eq.s32.totalorder %s17, 1
    %p167 = por %p165, %p166
    %p168 = scmp.ne.s32.totalorder %s159, %s160
    %p169 = scmp.eq.s32.totalorder %s17, 0
    %p170 = por %p168, %p169
    %p171 = scmp.ne.s32.totalorder %s159, %s160
    %p172 = scmp.eq.s32.totalorder %s18, 1
    %p173 = por %p171, %p172
    %p175 = scmp.ne.s32.totalorder %s160, %s174
    %p176 = scmp.eq.s32.totalorder %s18, 0
    %p177 = por %p175, %p176
    %s178 = ssub.s32 %s19, %s31
    %s179 = ssub.s32 %s20, %s27
    %s180 = sor.u32 %s178, %s179
    %p181 = scmp.eq.s32.totalorder %s180, 0
    %s183 = sadd.s32 %s182, 1
    %s184 = scalar_select %p181, %s182, %s183
    %p187 = pneg %p181
    %p188 = scmp.eq.s32.totalorder %s12, 1
    %p189 = por %p187, %p188
    %p190 = scmp.ne.s32.totalorder %s182, %s185
    %p191 = scmp.eq.s32.totalorder %s12, 0
    %p192 = por %p190, %p191
    %p193 = scmp.ne.s32.totalorder %s182, %s185
    %p194 = scmp.eq.s32.totalorder %s17, 1
    %p195 = por %p193, %p194
    %p196 = scmp.ne.s32.totalorder %s185, %s186
    %p197 = scmp.eq.s32.totalorder %s17, 0
    %p198 = por %p196, %p197
    %p199 = scmp.ne.s32.totalorder %s185, %s186
    %p200 = scmp.eq.s32.totalorder %s18, 1
    %p201 = por %p199, %p200
    %p203 = scmp.ne.s32.totalorder %s186, %s202
    %p204 = scmp.eq.s32.totalorder %s18, 0
    %p205 = por %p203, %p204
    %p206 = scmp.le.s32.totalorder 1, %s12
    %p207 = scmp.lt.s32.totalorder %s12, 3
    %p208 = pnand %p206, %p207
    %p209 = pneg %p208
    // Predicated region
    $region9: #{tpu_custom_call.1} parent=5 // pred_check
      _
    $region10: #{tpu_custom_call.1} parent=5 // pred_check_branch
      %211 = sbr.rel (%p208) target = $region12
    $region11: #{tpu_custom_call.1} parent=5 // pred_region
      %s212 = ssub.s32 %s12, 1
      // Predicated region
      $region13: #{tpu_custom_call.1} parent=11 // pred_check
        %p213 = pneg %p149
      $region14: #{tpu_custom_call.1} parent=11 // pred_check_branch
        %215 = sbr.rel (%p213) target = $region16
      $region15: #{tpu_custom_call.1} parent=11 // pred_region
        _
      $region16: #{tpu_custom_call.1} parent=11 // pred_fallthru
        _
      // Predicated region
      $region17: #{tpu_custom_call.1} parent=11 // pred_check
        %p216 = pneg %p170
      $region18: #{tpu_custom_call.1} parent=11 // pred_check_branch
        %218 = sbr.rel (%p216) target = $region20
      $region19: #{tpu_custom_call.1} parent=11 // pred_region
        _
      $region20: #{tpu_custom_call.1} parent=11 // pred_fallthru
        _
    $region12: #{tpu_custom_call.1} parent=5 // pred_fallthru
      _
    %p219 = scmp.lt.s32.totalorder %s12, 2
    // Predicated region
    $region21: #{tpu_custom_call.1} parent=5 // pred_check
      %p220 = pneg %p219
    $region22: #{tpu_custom_call.1} parent=5 // pred_check_branch
      %222 = sbr.rel (%p220) target = $region24
    $region23: #{tpu_custom_call.1} parent=5 // pred_region
      // Predicated region
      $region25: #{tpu_custom_call.1} parent=23 // pred_check
        %p223 = pneg %p44
      $region26: #{tpu_custom_call.1} parent=23 // pred_check_branch
        %225 = sbr.rel (%p223) target = $region28
      $region27: #{tpu_custom_call.1} parent=23 // pred_region
        %p226 = scmp.lt.s32.totalorder %s19, 1
        %s227 = scalar_select %p226, %s19, 1
        %s228 = smul.addr %s227, 7
        %s229 = smul.addr %s228, 4
        %s230 = scalar_lea.vmem %s0, %s229
      $region28: #{tpu_custom_call.1} parent=23 // pred_fallthru
        _
      // Predicated region
      $region29: #{tpu_custom_call.1} parent=23 // pred_check
        %p231 = pneg %p70
      $region30: #{tpu_custom_call.1} parent=23 // pred_check_branch
        %233 = sbr.rel (%p231) target = $region32
      $region31: #{tpu_custom_call.1} parent=23 // pred_region
        %p234 = scmp.lt.s32.totalorder %s19, 1
        %s235 = scalar_select %p234, %s19, 1
        %s236 = smul.addr %s235, 7
        %s237 = smul.addr %s236, 4
        %s238 = scalar_lea.vmem %s1, %s237
      $region32: #{tpu_custom_call.1} parent=23 // pred_fallthru
        _
      // Predicated region
      $region33: #{tpu_custom_call.1} parent=23 // pred_check
        %p239 = pneg %p96
      $region34: #{tpu_custom_call.1} parent=23 // pred_check_branch
        %241 = sbr.rel (%p239) target = $region36
      $region35: #{tpu_custom_call.1} parent=23 // pred_region
        %p242 = scmp.lt.s32.totalorder %s19, 1
        %s243 = scalar_select %p242, %s19, 1
        %s244 = smul.addr %s243, 7
        %s245 = smul.addr %s244, 4
        %s246 = scalar_lea.vmem %s2, %s245
      $region36: #{tpu_custom_call.1} parent=23 // pred_fallthru
        _
      // Predicated region
      $region37: #{tpu_custom_call.1} parent=23 // pred_check
        %p247 = pneg %p122
      $region38: #{tpu_custom_call.1} parent=23 // pred_check_branch
        %249 = sbr.rel (%p247) target = $region40
      $region39: #{tpu_custom_call.1} parent=23 // pred_region
        %p250 = scmp.lt.s32.totalorder %s19, 1
        %s251 = scalar_select %p250, %s19, 1
        %s252 = smul.addr %s251, 7
        %s253 = smul.addr %s252, 4
        %s254 = scalar_lea.vmem %s3, %s253
      $region40: #{tpu_custom_call.1} parent=23 // pred_fallthru
        _
    $region24: #{tpu_custom_call.1} parent=5 // pred_fallthru
      _
    %p255 = scmp.le.s32.totalorder 1, %s12
    %p256 = scmp.lt.s32.totalorder %s12, 3
    %p257 = pnand %p255, %p256
    %p258 = pneg %p257
    // Predicated region
    $region41: #{tpu_custom_call.1} parent=5 // pred_check
      _
    $region42: #{tpu_custom_call.1} parent=5 // pred_check_branch
      %260 = sbr.rel (%p257) target = $region44
    $region43: #{tpu_custom_call.1} parent=5 // pred_region
      %s261 = ssub.s32 %s12, 1
      %p262 = scmp.lt.s32.totalorder %s21, 1
      %s263 = scalar_select %p262, %s21, 1
      %s264 = smul.addr %s263, 7
      %s265 = smul.addr %s264, 4
      %s266 = scalar_lea.vmem %s0, %s265
      %p267 = pneg %p50
      %p268 = pneg %p47
      %p269 = scmp.lt.s32.totalorder %s21, 1
      %s270 = scalar_select %p269, %s21, 1
      %s271 = smul.addr %s270, 7
      %s272 = smul.addr %s271, 4
      %s273 = scalar_lea.vmem %s1, %s272
      %p274 = pneg %p76
      %p275 = pneg %p73
      %p276 = scmp.lt.s32.totalorder %s21, 1
      %s277 = scalar_select %p276, %s21, 1
      %s278 = smul.addr %s277, 7
      %s279 = smul.addr %s278, 4
      %s280 = scalar_lea.vmem %s2, %s279
      %p281 = pneg %p102
      %p282 = pneg %p99
      %p283 = scmp.lt.s32.totalorder %s21, 1
      %s284 = scalar_select %p283, %s21, 1
      %s285 = smul.addr %s284, 7
      %s286 = smul.addr %s285, 4
      %s287 = scalar_lea.vmem %s3, %s286
      %p288 = pneg %p128
      %p289 = pneg %p125
      %p290 = pneg %p149
      %p291 = pneg %p146
      %p292 = pneg %p170
      %p293 = pneg %p167
      %p294 = pneg %p198
      %p295 = pneg %p195
      %s296 = smul.u32 5, %s22
      %p297 = scmp.lt.s32.totalorder %s21, 1
      %s298 = scalar_select %p297, %s21, 1
      %p299 = scmp.lt.s32.totalorder %s296, 4
      %s300 = scalar_select %p299, %s296, 4
      %s301 = smul.addr %s298, 5
      %s302 = sadd.s32 %s300, %s301
      %s303 = smul.addr %s302, 8
      %s304 = scalar_lea.vmem %s6, %s303
      %p305 = scmp.lt.s32.totalorder %s21, 1
      %s306 = scalar_select %p305, %s21, 1
      %s307 = smul.addr %s306, 7
      %s308 = smul.addr %s307, 4
      %s309 = scalar_lea.vmem %s0, %s308
      %p310 = scmp.lt.s32.totalorder %s21, 1
      %s311 = scalar_select %p310, %s21, 1
      %s312 = smul.addr %s311, 7
      %s313 = smul.addr %s312, 4
      %s314 = scalar_lea.vmem %s1, %s313
      %p315 = scmp.lt.s32.totalorder %s21, 1
      %s316 = scalar_select %p315, %s21, 1
      %s317 = smul.addr %s316, 7
      %s318 = smul.addr %s317, 4
      %s319 = scalar_lea.vmem %s2, %s318
      %p320 = scmp.lt.s32.totalorder %s21, 1
      %s321 = scalar_select %p320, %s21, 1
      %s322 = smul.addr %s321, 7
      %s323 = smul.addr %s322, 4
      %s324 = scalar_lea.vmem %s3, %s323
      %s325 = smul.u32 5, %s22
      %p326 = scmp.lt.s32.totalorder %s21, 1
      %s327 = scalar_select %p326, %s21, 1
      %p328 = scmp.lt.s32.totalorder %s325, 4
      %s329 = scalar_select %p328, %s325, 4
      %s330 = smul.addr %s327, 5
      %s331 = sadd.s32 %s329, %s330
      %s332 = smul.addr %s331, 8
      %s333 = scalar_lea.vmem %s6, %s332
      %s334 = smul.u32 5, %s22
      %v336 = vld [vmem:[%s309] sm:$0xf]
      %v337 = vld [vmem:[%s309 + $0x4] sm:$0xf]
      %v338 = vld [vmem:[%s309 + $0x8] sm:$0xf]
      %v339 = vld [vmem:[%s309 + $0xc] sm:$0xf]
      %v340 = vld [vmem:[%s309 + $0x10] sm:$0xf]
      %v341 = vld [vmem:[%s4] sm:$0x3]
      %v342 = vld [vmem:[%s314] sm:$0xf]
      %v343 = vld [vmem:[%s314 + $0x4] sm:$0xf]
      %v344 = vld [vmem:[%s314 + $0x8] sm:$0xf]
      %v345 = vld [vmem:[%s314 + $0xc] sm:$0xf]
      %v346 = vld [vmem:[%s314 + $0x10] sm:$0xf]
      %s347 = scalar_lea.vmem %s4, 2
      %v348 = vld [vmem:[%s347] sm:$0x3]
      %v354 = vunpack.c.l.b16 %v342
      %v355 = vunpack.c.l.b16 %v343
      %v356 = vunpack.c.l.b16 %v344
      %v357 = vunpack.c.l.b16 %v345
      %v358 = vunpack.c.l.b16 %v346
      %v359 = vpack.c.b16 %v355, %v354
      %v360 = vpack.c.b16 %v357, %v356
      %v361 = vpack.c.b16 %v358, %v358
      %vm362 = vcmask 23552
      %v364 = vsel %vm362, %v359, 0
      %v367 = vsel %vm362, %v360, 0
      %v370 = vsel %vm362, %v361, 0
      %vm372 = vcmask 1040384
      %vm373 = vcmask 1041408
      %v374 = vsel %vm372, 4294967295, 65535
      %v375 = vsel %vm373, %v374, 0
      %v377 = vand.u32 %v348, %v375
      %379 = vmatpush.bf16.msra.mxu0 0
      %380 = vmatpush.bf16.msra.mxu0 0
      %381 = vmatpush.bf16.msra.mxu0 0
      %382 = vmatpush.bf16.msra.mxu0 0
      %383 = vmatpush.bf16.msra.mxu0 0
      %384 = vmatpush.bf16.msra.mxu0 0
      %385 = vmatpush.bf16.msra.mxu0 0
      %386 = vmatpush.bf16.msra.mxu0 %v377
      %387 = vmatmul.bf16.gmra.mxu0 %v364
      %v388 = vpop.f32.mrf.mxu0
      %v389 = vadd.f32 0.0, %v388
      %v390 = vpop.f32.mrf.mxu0
      %v391 = vadd.f32 0.0, %v390
      %392 = vmatmul.bf16.gmra.mxu0 %v367
      %v393 = vpop.f32.mrf.mxu0
      %v394 = vadd.f32 0.0, %v393
      %v395 = vpop.f32.mrf.mxu0
      %v396 = vadd.f32 0.0, %v395
      %397 = vmatmul.bf16.gmra.mxu0 %v370
      %v398 = vpop.f32.mrf.mxu0
      %v399 = vadd.f32 0.0, %v398
      %v400 = vpop.f32.mrf.mxu0
      %401 = vdwg.mxu0
      %v407 = vunpack.c.l.b16 %v336
      %v408 = vunpack.c.l.b16 %v337
      %v409 = vunpack.c.l.b16 %v338
      %v410 = vunpack.c.l.b16 %v339
      %v411 = vunpack.c.l.b16 %v340
      %v412 = vpack.c.b16 %v408, %v407
      %v413 = vpack.c.b16 %v410, %v409
      %v414 = vpack.c.b16 %v411, %v411
      %v416 = vsel %vm362, %v412, 0
      %v419 = vsel %vm362, %v413, 0
      %v422 = vsel %vm362, %v414, 0
      %v425 = vand.u32 %v341, %v375
      %427 = vmatpush.bf16.msra.mxu0 0
      %428 = vmatpush.bf16.msra.mxu0 0
      %429 = vmatpush.bf16.msra.mxu0 0
      %430 = vmatpush.bf16.msra.mxu0 0
      %431 = vmatpush.bf16.msra.mxu0 0
      %432 = vmatpush.bf16.msra.mxu0 0
      %433 = vmatpush.bf16.msra.mxu0 0
      %434 = vmatpush.bf16.msra.mxu0 %v425
      %435 = vmatmul.bf16.gmra.mxu0 %v416
      %v436 = vpop.f32.mrf.mxu0
      %v437 = vadd.f32 %v389, %v436
      %v438 = vpop.f32.mrf.mxu0
      %v439 = vadd.f32 %v391, %v438
      %440 = vmatmul.bf16.gmra.mxu0 %v419
      %v441 = vpop.f32.mrf.mxu0
      %v442 = vadd.f32 %v394, %v441
      %v443 = vpop.f32.mrf.mxu0
      %v444 = vadd.f32 %v396, %v443
      %445 = vmatmul.bf16.gmra.mxu0 %v422
      %v446 = vpop.f32.mrf.mxu0
      %v447 = vadd.f32 %v399, %v446
      %v448 = vpop.f32.mrf.mxu0
      %449 = vdwg.mxu0
      %v450 = vld [vmem:[%s309] sm:$0xf]
      %v451 = vld [vmem:[%s309 + $0x4] sm:$0xf]
      %v452 = vld [vmem:[%s309 + $0x8] sm:$0xf]
      %v453 = vld [vmem:[%s309 + $0xc] sm:$0xf]
      %v454 = vld [vmem:[%s309 + $0x10] sm:$0xf]
      %v455 = vld [vmem:[%s309 + $0x14] sm:$0x1]
      %s456 = scalar_lea.vmem %s4, 4
      %v457 = vld [vmem:[%s456] sm:$0x3]
      %v464 = vunpack.c.l.b16 %v450
      %v465 = vunpack.c.l.b16 %v451
      %v466 = vunpack.c.l.b16 %v452
      %v467 = vunpack.c.l.b16 %v453
      %v468 = vunpack.c.l.b16 %v454
      %v469 = vunpack.c.l.b16 %v455
      %v470 = vpack.c.b16 %v465, %v464
      %v471 = vpack.c.b16 %v467, %v466
      %v472 = vpack.c.b16 %v469, %v468
      %vm473 = vsmask.f32 7424
      %v475 = vshrl.u32 %v470, 16
      %v477 = vshll.u32 %v470, 16
      %v479 = vrot.slane %v477, 1
      %v480 = vor.u32 %v475, %v479
      %v482 = vshll.u32 %v471, 16
      %v484 = vrot.slane %v482, 1
      %v485 = vsel %vm473, %v480, %v484
      %v486 = vshrl.u32 %v471, 16
      %v488 = vor.u32 %v486, %v484
      %v490 = vshll.u32 %v472, 16
      %v492 = vrot.slane %v490, 1
      %v493 = vsel %vm473, %v488, %v492
      %v494 = vshrl.u32 %v472, 16
      %v496 = vor.u32 %v494, %v492
      %v498 = vsel %vm362, %v485, 0
      %v501 = vsel %vm362, %v493, 0
      %v504 = vsel %vm362, %v496, 0
      %v507 = vand.u32 %v457, %v375
      %509 = vmatpush.bf16.msra.mxu0 0
      %510 = vmatpush.bf16.msra.mxu0 0
      %511 = vmatpush.bf16.msra.mxu0 0
      %512 = vmatpush.bf16.msra.mxu0 0
      %513 = vmatpush.bf16.msra.mxu0 0
      %514 = vmatpush.bf16.msra.mxu0 0
      %515 = vmatpush.bf16.msra.mxu0 0
      %516 = vmatpush.bf16.msra.mxu0 %v507
      %517 = vmatmul.bf16.gmra.mxu0 %v498
      %v518 = vpop.f32.mrf.mxu0
      %v519 = vadd.f32 0.0, %v518
      %v520 = vpop.f32.mrf.mxu0
      %v521 = vadd.f32 0.0, %v520
      %522 = vmatmul.bf16.gmra.mxu0 %v501
      %v523 = vpop.f32.mrf.mxu0
      %v524 = vadd.f32 0.0, %v523
      %v525 = vpop.f32.mrf.mxu0
      %v526 = vadd.f32 0.0, %v525
      %527 = vmatmul.bf16.gmra.mxu0 %v504
      %v528 = vpop.f32.mrf.mxu0
      %v529 = vadd.f32 0.0, %v528
      %v530 = vpop.f32.mrf.mxu0
      %531 = vdwg.mxu0
      %v532 = vadd.f32 %v437, %v519
      %v533 = vadd.f32 %v439, %v521
      %v534 = vadd.f32 %v442, %v524
      %v535 = vadd.f32 %v444, %v526
      %v536 = vadd.f32 %v447, %v529
      %v537 = vld [vmem:[%s319] sm:$0xf]
      %v538 = vld [vmem:[%s319 + $0x4] sm:$0xf]
      %v539 = vld [vmem:[%s319 + $0x8] sm:$0xf]
      %v540 = vld [vmem:[%s319 + $0xc] sm:$0xf]
      %v541 = vld [vmem:[%s319 + $0x10] sm:$0xf]
      %s542 = scalar_lea.vmem %s4, 6
      %v543 = vld [vmem:[%s542] sm:$0x3]
      %v549 = vunpack.c.l.b16 %v537
      %v550 = vunpack.c.l.b16 %v538
      %v551 = vunpack.c.l.b16 %v539
      %v552 = vunpack.c.l.b16 %v540
      %v553 = vunpack.c.l.b16 %v541
      %v554 = vpack.c.b16 %v550, %v549
      %v555 = vpack.c.b16 %v552, %v551
      %v556 = vpack.c.b16 %v553, %v553
      %v558 = vsel %vm362, %v554, 0
      %v561 = vsel %vm362, %v555, 0
      %v564 = vsel %vm362, %v556, 0
      %v567 = vand.u32 %v543, %v375
      %569 = vmatpush.bf16.msra.mxu0 0
      %570 = vmatpush.bf16.msra.mxu0 0
      %571 = vmatpush.bf16.msra.mxu0 0
      %572 = vmatpush.bf16.msra.mxu0 0
      %573 = vmatpush.bf16.msra.mxu0 0
      %574 = vmatpush.bf16.msra.mxu0 0
      %575 = vmatpush.bf16.msra.mxu0 0
      %576 = vmatpush.bf16.msra.mxu0 %v567
      %577 = vmatmul.bf16.gmra.mxu0 %v558
      %v578 = vpop.f32.mrf.mxu0
      %v579 = vadd.f32 0.0, %v578
      %v580 = vpop.f32.mrf.mxu0
      %v581 = vadd.f32 0.0, %v580
      %582 = vmatmul.bf16.gmra.mxu0 %v561
      %v583 = vpop.f32.mrf.mxu0
      %v584 = vadd.f32 0.0, %v583
      %v585 = vpop.f32.mrf.mxu0
      %v586 = vadd.f32 0.0, %v585
      %587 = vmatmul.bf16.gmra.mxu0 %v564
      %v588 = vpop.f32.mrf.mxu0
      %v589 = vadd.f32 0.0, %v588
      %v590 = vpop.f32.mrf.mxu0
      %591 = vdwg.mxu0
      %v592 = vadd.f32 %v532, %v579
      %v593 = vadd.f32 %v533, %v581
      %v594 = vadd.f32 %v534, %v584
      %v595 = vadd.f32 %v535, %v586
      %v596 = vadd.f32 %v536, %v589
      %v597 = vld [vmem:[%s324] sm:$0xf]
      %v598 = vld [vmem:[%s324 + $0x4] sm:$0xf]
      %v599 = vld [vmem:[%s324 + $0x8] sm:$0xf]
      %v600 = vld [vmem:[%s324 + $0xc] sm:$0xf]
      %v601 = vld [vmem:[%s324 + $0x10] sm:$0xf]
      %s602 = scalar_lea.vmem %s4, 8
      %v603 = vld [vmem:[%s602] sm:$0x3]
      %v609 = vunpack.c.l.b16 %v597
      %v610 = vunpack.c.l.b16 %v598
      %v611 = vunpack.c.l.b16 %v599
      %v612 = vunpack.c.l.b16 %v600
      %v613 = vunpack.c.l.b16 %v601
      %v614 = vpack.c.b16 %v610, %v609
      %v615 = vpack.c.b16 %v612, %v611
      %v616 = vpack.c.b16 %v613, %v613
      %v618 = vsel %vm362, %v614, 0
      %v621 = vsel %vm362, %v615, 0
      %v624 = vsel %vm362, %v616, 0
      %v627 = vand.u32 %v603, %v375
      %629 = vmatpush.bf16.msra.mxu0 0
      %630 = vmatpush.bf16.msra.mxu0 0
      %631 = vmatpush.bf16.msra.mxu0 0
      %632 = vmatpush.bf16.msra.mxu0 0
      %633 = vmatpush.bf16.msra.mxu0 0
      %634 = vmatpush.bf16.msra.mxu0 0
      %635 = vmatpush.bf16.msra.mxu0 0
      %636 = vmatpush.bf16.msra.mxu0 %v627
      %637 = vmatmul.bf16.gmra.mxu0 %v618
      %v638 = vpop.f32.mrf.mxu0
      %v639 = vadd.f32 0.0, %v638
      %v640 = vpop.f32.mrf.mxu0
      %v641 = vadd.f32 0.0, %v640
      %642 = vmatmul.bf16.gmra.mxu0 %v621
      %v643 = vpop.f32.mrf.mxu0
      %v644 = vadd.f32 0.0, %v643
      %v645 = vpop.f32.mrf.mxu0
      %v646 = vadd.f32 0.0, %v645
      %647 = vmatmul.bf16.gmra.mxu0 %v624
      %v648 = vpop.f32.mrf.mxu0
      %v649 = vadd.f32 0.0, %v648
      %v650 = vpop.f32.mrf.mxu0
      %651 = vdwg.mxu0
      %v652 = vadd.f32 %v592, %v639
      %v653 = vadd.f32 %v593, %v641
      %v654 = vadd.f32 %v594, %v644
      %v655 = vadd.f32 %v595, %v646
      %v656 = vadd.f32 %v596, %v649
      %v657 = vld [vmem:[%s319] sm:$0xf]
      %v658 = vld [vmem:[%s319 + $0x4] sm:$0xf]
      %v659 = vld [vmem:[%s319 + $0x8] sm:$0xf]
      %v660 = vld [vmem:[%s319 + $0xc] sm:$0xf]
      %v661 = vld [vmem:[%s319 + $0x10] sm:$0xf]
      %v662 = vld [vmem:[%s319 + $0x14] sm:$0x1]
      %s663 = scalar_lea.vmem %s4, 10
      %v664 = vld [vmem:[%s663] sm:$0x3]
      %v671 = vunpack.c.l.b16 %v657
      %v672 = vunpack.c.l.b16 %v658
      %v673 = vunpack.c.l.b16 %v659
      %v674 = vunpack.c.l.b16 %v660
      %v675 = vunpack.c.l.b16 %v661
      %v676 = vunpack.c.l.b16 %v662
      %v677 = vpack.c.b16 %v672, %v671
      %v678 = vpack.c.b16 %v674, %v673
      %v679 = vpack.c.b16 %v676, %v675
      %v681 = vshrl.u32 %v677, 16
      %v683 = vshll.u32 %v677, 16
      %v685 = vrot.slane %v683, 1
      %v686 = vor.u32 %v681, %v685
      %v688 = vshll.u32 %v678, 16
      %v690 = vrot.slane %v688, 1
      %v691 = vsel %vm473, %v686, %v690
      %v692 = vshrl.u32 %v678, 16
      %v694 = vor.u32 %v692, %v690
      %v696 = vshll.u32 %v679, 16
      %v698 = vrot.slane %v696, 1
      %v699 = vsel %vm473, %v694, %v698
      %v700 = vshrl.u32 %v679, 16
      %v702 = vor.u32 %v700, %v698
      %v704 = vsel %vm362, %v691, 0
      %v707 = vsel %vm362, %v699, 0
      %v710 = vsel %vm362, %v702, 0
      %v713 = vand.u32 %v664, %v375
      %715 = vmatpush.bf16.msra.mxu0 0
      %716 = vmatpush.bf16.msra.mxu0 0
      %717 = vmatpush.bf16.msra.mxu0 0
      %718 = vmatpush.bf16.msra.mxu0 0
      %719 = vmatpush.bf16.msra.mxu0 0
      %720 = vmatpush.bf16.msra.mxu0 0
      %721 = vmatpush.bf16.msra.mxu0 0
      %722 = vmatpush.bf16.msra.mxu0 %v713
      %723 = vmatmul.bf16.gmra.mxu0 %v704
      %v724 = vpop.f32.mrf.mxu0
      %v725 = vadd.f32 0.0, %v724
      %v726 = vpop.f32.mrf.mxu0
      %v727 = vadd.f32 0.0, %v726
      %728 = vmatmul.bf16.gmra.mxu0 %v707
      %v729 = vpop.f32.mrf.mxu0
      %v730 = vadd.f32 0.0, %v729
      %v731 = vpop.f32.mrf.mxu0
      %v732 = vadd.f32 0.0, %v731
      %733 = vmatmul.bf16.gmra.mxu0 %v710
      %v734 = vpop.f32.mrf.mxu0
      %v735 = vadd.f32 0.0, %v734
      %v736 = vpop.f32.mrf.mxu0
      %737 = vdwg.mxu0
      %v738 = vadd.f32 %v652, %v725
      %v739 = vadd.f32 %v653, %v727
      %v740 = vadd.f32 %v654, %v730
      %v741 = vadd.f32 %v655, %v732
      %v742 = vadd.f32 %v656, %v735
      %v743 = vld [vmem:[%s309 + $0x14] sm:$0xf]
      %s744 = scalar_lea.vmem %s4, 12
      %v745 = vld [vmem:[%s744] sm:$0x3]
      %v747 = vunpack.c.l.b16 %v743
      %v748 = vpack.c.b16 %v466, %v465
      %v749 = vpack.c.b16 %v468, %v467
      %v750 = vpack.c.b16 %v747, %v747
      %v752 = vsel %vm362, %v748, 0
      %v755 = vsel %vm362, %v749, 0
      %v758 = vsel %vm362, %v750, 0
      %v761 = vand.u32 %v745, %v375
      %763 = vmatpush.bf16.msra.mxu0 0
      %764 = vmatpush.bf16.msra.mxu0 0
      %765 = vmatpush.bf16.msra.mxu0 0
      %766 = vmatpush.bf16.msra.mxu0 0
      %767 = vmatpush.bf16.msra.mxu0 0
      %768 = vmatpush.bf16.msra.mxu0 0
      %769 = vmatpush.bf16.msra.mxu0 0
      %770 = vmatpush.bf16.msra.mxu0 %v761
      %771 = vmatmul.bf16.gmra.mxu0 %v752
      %v772 = vpop.f32.mrf.mxu0
      %v773 = vadd.f32 0.0, %v772
      %v774 = vpop.f32.mrf.mxu0
      %v775 = vadd.f32 0.0, %v774
      %776 = vmatmul.bf16.gmra.mxu0 %v755
      %v777 = vpop.f32.mrf.mxu0
      %v778 = vadd.f32 0.0, %v777
      %v779 = vpop.f32.mrf.mxu0
      %v780 = vadd.f32 0.0, %v779
      %781 = vmatmul.bf16.gmra.mxu0 %v758
      %v782 = vpop.f32.mrf.mxu0
      %v783 = vadd.f32 0.0, %v782
      %v784 = vpop.f32.mrf.mxu0
      %785 = vdwg.mxu0
      %v786 = vadd.f32 %v738, %v773
      %v787 = vadd.f32 %v739, %v775
      %v788 = vadd.f32 %v740, %v778
      %v789 = vadd.f32 %v741, %v780
      %v790 = vadd.f32 %v742, %v783
      %v791 = vld [vmem:[%s314 + $0x4] sm:$0xf]
      %v792 = vld [vmem:[%s314 + $0x8] sm:$0xf]
      %v793 = vld [vmem:[%s314 + $0xc] sm:$0xf]
      %v794 = vld [vmem:[%s314 + $0x10] sm:$0xf]
      %v795 = vld [vmem:[%s314 + $0x14] sm:$0xf]
      %s796 = scalar_lea.vmem %s4, 14
      %v797 = vld [vmem:[%s796] sm:$0x3]
      %v803 = vunpack.c.l.b16 %v791
      %v804 = vunpack.c.l.b16 %v792
      %v805 = vunpack.c.l.b16 %v793
      %v806 = vunpack.c.l.b16 %v794
      %v807 = vunpack.c.l.b16 %v795
      %v808 = vpack.c.b16 %v804, %v803
      %v809 = vpack.c.b16 %v806, %v805
      %v810 = vpack.c.b16 %v807, %v807
      %v812 = vsel %vm362, %v808, 0
      %v815 = vsel %vm362, %v809, 0
      %v818 = vsel %vm362, %v810, 0
      %v821 = vand.u32 %v797, %v375
      %823 = vmatpush.bf16.msra.mxu0 0
      %824 = vmatpush.bf16.msra.mxu0 0
      %825 = vmatpush.bf16.msra.mxu0 0
      %826 = vmatpush.bf16.msra.mxu0 0
      %827 = vmatpush.bf16.msra.mxu0 0
      %828 = vmatpush.bf16.msra.mxu0 0
      %829 = vmatpush.bf16.msra.mxu0 0
      %830 = vmatpush.bf16.msra.mxu0 %v821
      %831 = vmatmul.bf16.gmra.mxu0 %v812
      %v832 = vpop.f32.mrf.mxu0
      %v833 = vadd.f32 0.0, %v832
      %v834 = vpop.f32.mrf.mxu0
      %v835 = vadd.f32 0.0, %v834
      %836 = vmatmul.bf16.gmra.mxu0 %v815
      %v837 = vpop.f32.mrf.mxu0
      %v838 = vadd.f32 0.0, %v837
      %v839 = vpop.f32.mrf.mxu0
      %v840 = vadd.f32 0.0, %v839
      %841 = vmatmul.bf16.gmra.mxu0 %v818
      %v842 = vpop.f32.mrf.mxu0
      %v843 = vadd.f32 0.0, %v842
      %v844 = vpop.f32.mrf.mxu0
      %845 = vdwg.mxu0
      %v846 = vadd.f32 %v786, %v833
      %v847 = vadd.f32 %v787, %v835
      %v848 = vadd.f32 %v788, %v838
      %v849 = vadd.f32 %v789, %v840
      %v850 = vadd.f32 %v790, %v843
      %v851 = vld [vmem:[%s309 + $0x4] sm:$0xf]
      %v852 = vld [vmem:[%s309 + $0x8] sm:$0xf]
      %v853 = vld [vmem:[%s309 + $0xc] sm:$0xf]
      %v854 = vld [vmem:[%s309 + $0x10] sm:$0xf]
      %v855 = vld [vmem:[%s309 + $0x14] sm:$0xf]
      %v856 = vld [vmem:[%s309 + $0x18] sm:$0x1]
      %s857 = scalar_lea.vmem %s4, 16
      %v858 = vld [vmem:[%s857] sm:$0x3]
      %v865 = vunpack.c.l.b16 %v851
      %v866 = vunpack.c.l.b16 %v852
      %v867 = vunpack.c.l.b16 %v853
      %v868 = vunpack.c.l.b16 %v854
      %v869 = vunpack.c.l.b16 %v855
      %v870 = vunpack.c.l.b16 %v856
      %v871 = vpack.c.b16 %v866, %v865
      %v872 = vpack.c.b16 %v868, %v867
      %v873 = vpack.c.b16 %v870, %v869
      %v875 = vshrl.u32 %v871, 16
      %v877 = vshll.u32 %v871, 16
      %v879 = vrot.slane %v877, 1
      %v880 = vor.u32 %v875, %v879
      %v882 = vshll.u32 %v872, 16
      %v884 = vrot.slane %v882, 1
      %v885 = vsel %vm473, %v880, %v884
      %v886 = vshrl.u32 %v872, 16
      %v888 = vor.u32 %v886, %v884
      %v890 = vshll.u32 %v873, 16
      %v892 = vrot.slane %v890, 1
      %v893 = vsel %vm473, %v888, %v892
      %v894 = vshrl.u32 %v873, 16
      %v896 = vor.u32 %v894, %v892
      %v898 = vsel %vm362, %v885, 0
      %v901 = vsel %vm362, %v893, 0
      %v904 = vsel %vm362, %v896, 0
      %v907 = vand.u32 %v858, %v375
      %909 = vmatpush.bf16.msra.mxu0 0
      %910 = vmatpush.bf16.msra.mxu0 0
      %911 = vmatpush.bf16.msra.mxu0 0
      %912 = vmatpush.bf16.msra.mxu0 0
      %913 = vmatpush.bf16.msra.mxu0 0
      %914 = vmatpush.bf16.msra.mxu0 0
      %915 = vmatpush.bf16.msra.mxu0 0
      %916 = vmatpush.bf16.msra.mxu0 %v907
      %917 = vmatmul.bf16.gmra.mxu0 %v898
      %v918 = vpop.f32.mrf.mxu0
      %v919 = vadd.f32 0.0, %v918
      %v920 = vpop.f32.mrf.mxu0
      %v921 = vadd.f32 0.0, %v920
      %922 = vmatmul.bf16.gmra.mxu0 %v901
      %v923 = vpop.f32.mrf.mxu0
      %v924 = vadd.f32 0.0, %v923
      %v925 = vpop.f32.mrf.mxu0
      %v926 = vadd.f32 0.0, %v925
      %927 = vmatmul.bf16.gmra.mxu0 %v904
      %v928 = vpop.f32.mrf.mxu0
      %v929 = vadd.f32 0.0, %v928
      %v930 = vpop.f32.mrf.mxu0
      %931 = vdwg.mxu0
      %v932 = vadd.f32 %v846, %v919
      %v933 = vadd.f32 %v847, %v921
      %v934 = vadd.f32 %v848, %v924
      %v935 = vadd.f32 %v849, %v926
      %v936 = vadd.f32 %v850, %v929
      %v937 = vld [vmem:[%s5] sm:$0x1]
      %v939 = vperm.slane %v937, 0
      %v941 = vadd.f32 %v932, %v939
      %v942 = vadd.f32 %v933, %v939
      %v943 = vadd.f32 %v934, %v939
      %v944 = vadd.f32 %v935, %v939
      %v945 = vadd.f32 %v936, %v939
      %v946 = vmax.f32 %v941, 0.0
      %v947 = vmax.f32 %v942, 0.0
      %v948 = vmax.f32 %v943, 0.0
      %v949 = vmax.f32 %v944, 0.0
      %v950 = vmax.f32 %v945, 0.0
      %vm951 = vcmask 130048
      %952 = vst.msk [vmem:[%s333] sm:$0xff] %vm951, %v946
      %953 = vst.msk [vmem:[%s333 + $0x8] sm:$0xff] %vm951, %v947
      %954 = vst.msk [vmem:[%s333 + $0x10] sm:$0xff] %vm951, %v948
      %955 = vst.msk [vmem:[%s333 + $0x18] sm:$0xff] %vm951, %v949
      %956 = vst.msk [vmem:[%s333 + $0x20] sm:$0xff] %vm951, %v950
      %s957 = smul.u32 5, %s22
      %p958 = scmp.lt.s32.totalorder %s21, 1
      %s959 = scalar_select %p958, %s21, 1
      %p960 = scmp.lt.s32.totalorder %s957, 4
      %s961 = scalar_select %p960, %s957, 4
      %s962 = smul.addr %s959, 5
      %s963 = sadd.s32 %s961, %s962
      %s964 = smul.addr %s963, 8
      %s965 = scalar_lea.vmem %s6, %s964
      // Predicated region
      $region45: #{tpu_custom_call.1} parent=43 // pred_check
        %p966 = pneg %p195
      $region46: #{tpu_custom_call.1} parent=43 // pred_check_branch
        %968 = sbr.rel (%p966) target = $region48
      $region47: #{tpu_custom_call.1} parent=43 // pred_region
        %s969 = smul.u32 5, %s22
      $region48: #{tpu_custom_call.1} parent=43 // pred_fallthru
        _
    $region44: #{tpu_custom_call.1} parent=5 // pred_fallthru
      _
    %p970 = scmp.le.s32.totalorder 2, %s12
    // Predicated region
    $region49: #{tpu_custom_call.1} parent=5 // pred_check
      %p971 = pneg %p970
    $region50: #{tpu_custom_call.1} parent=5 // pred_check_branch
      %973 = sbr.rel (%p971) target = $region52
    $region51: #{tpu_custom_call.1} parent=5 // pred_region
      %s974 = ssub.s32 %s12, 2
      // Predicated region
      $region53: #{tpu_custom_call.1} parent=51 // pred_check
        %p975 = pneg %p201
      $region54: #{tpu_custom_call.1} parent=51 // pred_check_branch
        %977 = sbr.rel (%p975) target = $region56
      $region55: #{tpu_custom_call.1} parent=51 // pred_region
        %s978 = smul.u32 5, %s24
        %p979 = scmp.lt.s32.totalorder %s23, 1
        %s980 = scalar_select %p979, %s23, 1
        %p981 = scmp.lt.s32.totalorder %s978, 4
        %s982 = scalar_select %p981, %s978, 4
        %s983 = smul.addr %s980, 5
        %s984 = sadd.s32 %s982, %s983
        %s985 = smul.addr %s984, 8
        %s986 = scalar_lea.vmem %s6, %s985
      $region56: #{tpu_custom_call.1} parent=51 // pred_fallthru
        _
    $region52: #{tpu_custom_call.1} parent=5 // pred_fallthru
      _
  $region6: #{tpu_custom_call.1} parent=0 // loop_footer
    %s16 = sadd.s32 1, %s12
  $region7: #{tpu_custom_call.1} parent=0 // loop_footer_branch
    %11 = sbr.rel target = $region3
  $region8: #{tpu_custom_call.1} parent=0 // loop_exit
    _

</llo_original>
